<compile_context>
chip_gen: v5e
topology: v5e:2x2
jax: 0.10.0
libtpu: 0.0.40
codegen_flags: <defaults>
</compile_context>

<pallas_src>
import functools

import jax
import jax.numpy as jnp
from jax.experimental import pallas as pl
from jax.experimental.pallas import tpu as pltpu


def _round_up(x, m):
    return ((x + m - 1) // m) * m


def _min_sublane(dtype):
    n = jnp.dtype(dtype).itemsize
    if n == 2:
        return 16
    if n == 1:
        return 32
    return 8


# --------------------------------------------------------------------------
# Kernels
# --------------------------------------------------------------------------
def _partial_dot(x_ref, w_ref, compute_dtype):
    xv = x_ref[...]
    wv = w_ref[...]
    if compute_dtype is not None:
        xv = xv.astype(compute_dtype)
        wv = wv.astype(compute_dtype)
    return jnp.dot(xv, wv, preferred_element_type=jnp.float32)


def _agg_kernel_inplace(x_ref, w_ref, b_ref, o_ref, *, compute_dtype):
    """float32 output: accumulate directly into o_ref (resident across K)."""
    k = pl.program_id(2)
    p = _partial_dot(x_ref, w_ref, compute_dtype)

    @pl.when(k == 0)
    def _():
        o_ref[...] = p

    @pl.when(k != 0)
    def _():
        o_ref[...] += p

    @pl.when(k == pl.num_programs(2) - 1)
    def _():
        o_ref[...] = jnp.maximum(o_ref[...] + b_ref[...].astype(jnp.float32), 0.0)


def _agg_kernel_scratch(x_ref, w_ref, b_ref, o_ref, acc_ref, *, compute_dtype):
    """Non-f32 output: f32 VMEM accumulator, cast in the epilogue."""
    k = pl.program_id(2)
    p = _partial_dot(x_ref, w_ref, compute_dtype)

    @pl.when(k == 0)
    def _():
        acc_ref[...] = p

    @pl.when(k != 0)
    def _():
        acc_ref[...] += p

    @pl.when(k == pl.num_programs(2) - 1)
    def _():
        y = acc_ref[...] + b_ref[...].astype(jnp.float32)
        o_ref[...] = jnp.maximum(y, 0.0).astype(o_ref.dtype)


# --------------------------------------------------------------------------
# One-time parameter preparation (transpose + pad the reusable weight/bias)
# --------------------------------------------------------------------------
def prepare_aggregator_params(weight, bias, *, tile_n=512, tile_k=1024):
    """weight: (d_out, d_in) PyTorch layout; bias: (d_out,).

    Returns a dict with the weight transposed to [d_in, d_out] (lane-dense on
    d_out) and padded to tile multiples — do this once and reuse it.
    """
    d_out, d_in = weight.shape

    # K tile: full dim if it fits; else the largest 128-multiple divisor of
    # d_in (so the activation never needs per-call K padding); else pad.
    if d_in <= tile_k:
        tk = max(d_in, 1)
    else:
        tk = 0
        for cand in range(tile_k, 127, -128):
            if d_in % cand == 0:
                tk = cand
                break
        if tk == 0:  # no nice divisor: fall back to padding (rare)
            tk = tile_k
    Kp = _round_up(d_in, tk)

    tn = d_out if d_out <= tile_n else tile_n
    Np = _round_up(d_out, tn)

    w_t = weight.T  # (d_in, d_out) — single HBM transpose, hoisted out of calls
    if (Kp, Np) != (d_in, d_out):
        w_t = jnp.pad(w_t, ((0, Kp - d_in), (0, Np - d_out)))
    b = bias if Np == d_out else jnp.pad(bias, (0, Np - d_out))

    return dict(w_t=w_t, b=b.reshape(1, Np), d_in=d_in, d_out=d_out,
                tk=tk, tn=tn, Kp=Kp, Np=Np)


# --------------------------------------------------------------------------
# Forward
# --------------------------------------------------------------------------
def aggregator_forward(x, params, *, tile_m=512, compute_dtype=None,
                       use_pallas=None):
    """y = relu(x @ weight.T + bias), matching nn.Linear(in, out) + nn.ReLU()."""
    B, d_in = x.shape
    assert d_in == params["d_in"], "weight/input dim mismatch"
    d_out = params["d_out"]
    w_t, b_row = params["w_t"], params["b"]
    tk, tn, Kp, Np = params["tk"], params["tn"], params["Kp"], params["Np"]
    out_dtype = x.dtype

    # Tiny problems: launch + per-grid-step overhead dominates; plain XLA wins.
    if use_pallas is None:
        use_pallas = (B * d_in * d_out) >= (1 << 21)
    if not use_pallas:
        y = x @ w_t[:d_in, :d_out] + b_row[0, :d_out]
        return jnp.maximum(y, 0.0).astype(out_dtype)

    # ---- M tile (dtype-aware sublane rounding) ----
    sub = _min_sublane(x.dtype)
    tm = _round_up(B, sub) if B <= tile_m else tile_m
    Bp = _round_up(B, tm)

    # ---- megacore guard (v7x): keep >= 2 blocks on the parallel axes ----
    if (Bp // tm) * (Np // tn) < 2:
        if tn % 256 == 0:
            tn //= 2
        elif tm % (2 * sub) == 0 and tm >= 2 * sub:
            tm //= 2

    grid = (Bp // tm, Np // tn, Kp // tk)   # reduction axis (K) last

    # ---- pad activation only when strictly needed ----
    xp = x if (Bp == B and Kp == d_in) else jnp.pad(
        x, ((0, Bp - B), (0, Kp - d_in)))

    # ---- kernel selection: f32 accumulates straight into the output ----
    inplace = jnp.dtype(out_dtype) == jnp.dtype(jnp.float32)
    if inplace:
        kernel = functools.partial(_agg_kernel_inplace, compute_dtype=compute_dtype)
        scratch_shapes = []
    else:
        kernel = functools.partial(_agg_kernel_scratch, compute_dtype=compute_dtype)
        scratch_shapes = [pltpu.VMEM((tm, tn), jnp.float32)]

    # ---- explicit VMEM budget: footprint (double-buffered) + ~30% headroom ----
    isz = lambda dt: jnp.dtype(dt).itemsize
    footprint = 2 * (tm * tk * isz(x.dtype) + tk * tn * isz(w_t.dtype)
                     + tn * isz(b_row.dtype) + tm * tn * isz(out_dtype))
    if not inplace:
        footprint += tm * tn * 4
    vmem_limit = min(int(footprint * 1.3) + (2 << 20), 48 << 20)

    out = pl.pallas_call(
        kernel,
        out_shape=jax.ShapeDtypeStruct((Bp, Np), out_dtype),
        grid_spec=pltpu.PrefetchScalarGridSpec(
            num_scalar_prefetch=0,
            grid=grid,
            in_specs=[
                pl.BlockSpec((tm, tk), lambda i, j, k: (i, k)),   # x
                pl.BlockSpec((tk, tn), lambda i, j, k: (k, j)),   # weight.T
                pl.BlockSpec((1, tn), lambda i, j, k: (0, j)),    # bias
            ],
            out_specs=pl.BlockSpec((tm, tn), lambda i, j, k: (i, j)),
            scratch_shapes=scratch_shapes,
        ),
        compiler_params=pltpu.CompilerParams(
            dimension_semantics=("parallel", "parallel", "arbitrary"),
            vmem_limit_bytes=vmem_limit,
        ),
    )(xp, w_t, b_row)

    if Bp != B or Np != d_out:
        out = out[:B, :d_out]
    return out


# --------------------------------------------------------------------------
if __name__ == "__main__":
    key = jax.random.PRNGKey(0)
    kx, kw, kb, kx2, kw2, kb2, kx3, kw3, kb3 = jax.random.split(key, 9)

    # --- small shape implied by the module (forced through the Pallas path) ---
    batch, input_dim, output_dim = 8, 32, 64
    x = jax.random.normal(kx, (batch, input_dim), dtype=jnp.float32)
    weight = jax.random.normal(kw, (output_dim, input_dim), dtype=jnp.float32) * 0.1
    bias = jax.random.normal(kb, (output_dim,), dtype=jnp.float32) * 0.1

    params = prepare_aggregator_params(weight, bias)      # one-time prep
    y = jax.block_until_ready(aggregator_forward(x, params, use_pallas=True))
    y_ref = jnp.maximum(x @ weight.T + bias, 0.0)
    assert y.shape == (batch, output_dim)
    assert jnp.allclose(y, y_ref, atol=1e-5, rtol=1e-5)

    # Auto-dispatch falls back to plain XLA for this tiny problem.
    y_auto = jax.block_until_ready(aggregator_forward(x, params))
    assert jnp.allclose(y_auto, y_ref, atol=1e-5, rtol=1e-5)

    # --- larger shape: multi-block M and K grid, no activation K padding ---
    B2, D_in2, D_out2 = 640, 1280, 320
    x2 = jax.random.normal(kx2, (B2, D_in2), dtype=jnp.float32)
    w2 = jax.random.normal(kw2, (D_out2, D_in2), dtype=jnp.float32) * 0.05
    b2 = jax.random.normal(kb2, (D_out2,), dtype=jnp.float32) * 0.05
    p2 = prepare_aggregator_params(w2, b2)
    y2 = jax.block_until_ready(aggregator_forward(x2, p2, use_pallas=True))
    y2_ref = jnp.maximum(x2 @ w2.T + b2, 0.0)
    assert y2.shape == (B2, D_out2)
    assert jnp.allclose(y2, y2_ref, atol=1e-3, rtol=1e-3)

    # --- shape that triggers the megacore guard (1x1 parallel grid -> split N) ---
    B3, D_in3, D_out3 = 512, 256, 512
    x3 = jax.random.normal(kx3, (B3, D_in3), dtype=jnp.float32)
    w3 = jax.random.normal(kw3, (D_out3, D_in3), dtype=jnp.float32) * 0.05
    b3 = jax.random.normal(kb3, (D_out3,), dtype=jnp.float32) * 0.05
    p3 = prepare_aggregator_params(w3, b3)
    y3 = jax.block_until_ready(aggregator_forward(x3, p3, use_pallas=True))
    y3_ref = jnp.maximum(x3 @ w3.T + b3, 0.0)
    assert y3.shape == (B3, D_out3)
    assert jnp.allclose(y3, y3_ref, atol=1e-3, rtol=1e-3)

    print("KERNEL_OK")
</pallas_src>

<mosaic_0001>
module attributes {stable_mosaic.version = 11 : i64} {
  func.func @_agg_kernel_inplace(%arg0: i32, %arg1: i32, %arg2: i32, %arg3: memref<8x32xf32, #tpu.memory_space<vmem>>, %arg4: memref<32x64xf32, #tpu.memory_space<vmem>>, %arg5: memref<1x64xf32, #tpu.memory_space<vmem>>, %arg6: memref<8x64xf32, #tpu.memory_space<vmem>>) attributes {dimension_semantics = [#tpu.dimension_semantics<parallel>, #tpu.dimension_semantics<parallel>, #tpu.dimension_semantics<arbitrary>], iteration_bounds = array<i64: 1, 1, 1>, scalar_prefetch = 0 : i64, scratch_operands = 0 : i64, tpu.core_type = #tpu.core_type<tc>, window_params = [{transform_indices = @transform_0, window_bounds = array<i64: 8, 32>}, {transform_indices = @transform_1, window_bounds = array<i64: 32, 64>}, {transform_indices = @transform_2, window_bounds = array<i64: 1, 64>}, {transform_indices = @transform_3, window_bounds = array<i64: 8, 64>}]} {
    %c0 = arith.constant 0 : index
    %c0_0 = arith.constant 0 : index
    %0 = vector.load %arg3[%c0, %c0_0] : memref<8x32xf32, #tpu.memory_space<vmem>>, vector<8x32xf32>
    %c0_1 = arith.constant 0 : index
    %c0_2 = arith.constant 0 : index
    %1 = vector.load %arg4[%c0_1, %c0_2] : memref<32x64xf32, #tpu.memory_space<vmem>>, vector<32x64xf32>
    %cst = arith.constant dense<0.000000e+00> : vector<8x64xf32>
    %2 = tpu.matmul %0, %1, %cst {dimension_numbers = #tpu.dot_dimension_numbers<[1], [0], [0], [1], [0, 0, 1, 1], [], []>} : vector<8x32xf32>, vector<32x64xf32>, vector<8x64xf32> -> vector<8x64xf32>
    %c0_i32 = arith.constant 0 : i32
    %3 = arith.cmpi eq, %arg2, %c0_i32 : i32
    %4 = arith.extui %3 : i1 to i32
    %c0_i32_3 = arith.constant 0 : i32
    %5 = arith.cmpi ne, %4, %c0_i32_3 : i32
    scf.if %5 {
      %c0_8 = arith.constant 0 : index
      %c0_9 = arith.constant 0 : index
      %12 = vector.load %arg6[%c0_8, %c0_9] : memref<8x64xf32, #tpu.memory_space<vmem>>, vector<8x64xf32>
      tpu.vector_store %arg6[%c0_8, %c0_9], %2 {strides = array<i32>} : memref<8x64xf32, #tpu.memory_space<vmem>>, vector<8x64xf32>,
    } else {
    }
    %c0_i32_4 = arith.constant 0 : i32
    %6 = arith.cmpi ne, %arg2, %c0_i32_4 : i32
    %7 = arith.extui %6 : i1 to i32
    %c0_i32_5 = arith.constant 0 : i32
    %8 = arith.cmpi ne, %7, %c0_i32_5 : i32
    scf.if %8 {
      %c0_8 = arith.constant 0 : index
      %c0_9 = arith.constant 0 : index
      %12 = vector.load %arg6[%c0_8, %c0_9] : memref<8x64xf32, #tpu.memory_space<vmem>>, vector<8x64xf32>
      %13 = arith.addf %12, %2 : vector<8x64xf32>
      %c0_10 = arith.constant 0 : index
      %c0_11 = arith.constant 0 : index
      %14 = vector.load %arg6[%c0_10, %c0_11] : memref<8x64xf32, #tpu.memory_space<vmem>>, vector<8x64xf32>
      tpu.vector_store %arg6[%c0_10, %c0_11], %13 {strides = array<i32>} : memref<8x64xf32, #tpu.memory_space<vmem>>, vector<8x64xf32>,
    } else {
    }
    %c0_i32_6 = arith.constant 0 : i32
    %9 = arith.cmpi eq, %arg2, %c0_i32_6 : i32
    %10 = arith.extui %9 : i1 to i32
    %c0_i32_7 = arith.constant 0 : i32
    %11 = arith.cmpi ne, %10, %c0_i32_7 : i32
    scf.if %11 {
      %c0_8 = arith.constant 0 : index
      %c0_9 = arith.constant 0 : index
      %12 = vector.load %arg6[%c0_8, %c0_9] : memref<8x64xf32, #tpu.memory_space<vmem>>, vector<8x64xf32>
      %c0_10 = arith.constant 0 : index
      %c0_11 = arith.constant 0 : index
      %13 = vector.load %arg5[%c0_10, %c0_11] : memref<1x64xf32, #tpu.memory_space<vmem>>, vector<1x64xf32>
      %14 = vector.broadcast %13 : vector<1x64xf32> to vector<8x64xf32>
      %15 = arith.addf %12, %14 : vector<8x64xf32>
      %cst_12 = arith.constant 0.000000e+00 : f32
      %16 = vector.broadcast %cst_12 : f32 to vector<8x64xf32>
      %17 = arith.maximumf %15, %16 : vector<8x64xf32>
      %c0_13 = arith.constant 0 : index
      %c0_14 = arith.constant 0 : index
      %18 = vector.load %arg6[%c0_13, %c0_14] : memref<8x64xf32, #tpu.memory_space<vmem>>, vector<8x64xf32>
      tpu.vector_store %arg6[%c0_13, %c0_14], %17 {strides = array<i32>} : memref<8x64xf32, #tpu.memory_space<vmem>>, vector<8x64xf32>,
    } else {
    }
    return
  }
  func.func @transform_0(%arg0: i32, %arg1: i32, %arg2: i32) -> (i32, i32) {
    %c0_i32 = arith.constant 0 : i32
    return %arg0, %arg2 : i32, i32
  }
  func.func @transform_1(%arg0: i32, %arg1: i32, %arg2: i32) -> (i32, i32) {
    %c0_i32 = arith.constant 0 : i32
    return %arg2, %arg1 : i32, i32
  }
  func.func @transform_2(%arg0: i32, %arg1: i32, %arg2: i32) -> (i32, i32) {
    %c0_i32 = arith.constant 0 : i32
    %c0_i32_0 = arith.constant 0 : i32
    return %c0_i32, %arg1 : i32, i32
  }
  func.func @transform_3(%arg0: i32, %arg1: i32, %arg2: i32) -> (i32, i32) {
    %c0_i32 = arith.constant 0 : i32
    return %arg0, %arg1 : i32, i32
  }
}

</mosaic_0001>

<llo_original>
// kernel: tpu_custom_call.1
$region0: #{tpu_custom_call.1}
  #allocation0 [shape = 'u32[]', space=smem, size = 0x4, offset = 0x4, fixed_abs, tag = 'smem constant byte address 0x4 - core index']
  #allocation1 [shape = 'u32[72,128]{1,0:T(1,128)}', space=vmem, size = 0x9000, scoped, tag = 'internal scratch']
  %s0 = inlined_call_operand.hbm [shape: f32[8,32], index: 0, kind: input, shape index: {}]
  %s1 = inlined_call_operand.hbm [shape: f32[32,64], index: 1, kind: input, shape index: {}]
  %s2 = inlined_call_operand.vmem [shape: f32[1,64], index: 2, kind: input, shape index: {}]
  %s3 = inlined_call_operand.hbm [shape: f32[8,64], index: 3, kind: output, shape index: {}]
  %s4 = sld [smem:[#allocation0]]
  $region42: #{tpu_custom_call.1} parent=0
    _
  %s6 = ssub.s32 1, %s4
  %s7 = scalar_select 0, %s6, %s4
  $region1: #{tpu_custom_call.1} parent=0
    #allocation2 [shape = 'u8[4096]{0}', space=vmem, size = 0x1000, scoped, tag = 'input window, operand 0, single buffered']
    #allocation3 [shape = 's32[1]{0}', space=sflag, size = 0x4, scoped, tag = 'scoped memory for tpu_custom_call.1']
    #allocation4 [shape = 's32[1]{0}', space=sflag, size = 0x4, scoped, tag = 'scoped memory for tpu_custom_call.1']
    #allocation5 [shape = 'u8[16384]{0}', space=vmem, size = 0x4000, scoped, tag = 'input window, operand 1, single buffered']
    #allocation6 [shape = 's32[1]{0}', space=sflag, size = 0x4, scoped, tag = 'scoped memory for tpu_custom_call.1']
    #allocation7 [shape = 'u8[4096]{0}', space=vmem, size = 0x1000, scoped, tag = 'output window, operand 0, single buffered']
    %8 = vsyncpa [#allocation3], 0
    %9 = vsyncpa [#allocation6], 0
    %10 = vsyncpa [#allocation4], 0
    // Predicated region
    $region2: #{tpu_custom_call.1} parent=1 // pred_check
      _
    $region3: #{tpu_custom_call.1} parent=1 // pred_check_branch
      %12 = sbr.rel (0) target = $region5
    $region4: #{tpu_custom_call.1} parent=1 // pred_region
      %14 = vsyncadd [#allocation3], 0
      %s16 = sshll.u32 %s0, 4
      %s17 = int_to_ptr.hbm [resolvable:$true] %s16
      %s18 = sshll.u32 [#allocation2], 4
      %s19 = int_to_ptr.vmem [resolvable:$true] %s18
      %21 = dma.hbm_to_vmem [thread:$0]  %s17, 128, %s19, [#allocation3]
    $region5: #{tpu_custom_call.1} parent=1 // pred_fallthru
      _
    // Predicated region
    $region6: #{tpu_custom_call.1} parent=1 // pred_check
      _
    $region7: #{tpu_custom_call.1} parent=1 // pred_check_branch
      %23 = sbr.rel (0) target = $region9
    $region8: #{tpu_custom_call.1} parent=1 // pred_region
      %25 = vsyncadd [#allocation6], 0
      %s26 = sshll.u32 %s1, 4
      %s27 = int_to_ptr.hbm [resolvable:$true] %s26
      %s28 = sshll.u32 [#allocation5], 4
      %s29 = int_to_ptr.vmem [resolvable:$true] %s28
      %34 = dma.hbm_to_vmem [thread:$0]  %s27, 512, %s29, [#allocation6], 128, 128, 8
    $region9: #{tpu_custom_call.1} parent=1 // pred_fallthru
      _
    // Predicated region
    $region10: #{tpu_custom_call.1} parent=1 // pred_check
      _
    $region11: #{tpu_custom_call.1} parent=1 // pred_check_branch
      %36 = sbr.rel (0) target = $region13
    $region12: #{tpu_custom_call.1} parent=1 // pred_region
      _
    $region13: #{tpu_custom_call.1} parent=1 // pred_fallthru
      _
    // Predicated region
    $region14: #{tpu_custom_call.1} parent=1 // pred_check
      _
    $region15: #{tpu_custom_call.1} parent=1 // pred_check_branch
      %38 = sbr.rel (0) target = $region17
    $region16: #{tpu_custom_call.1} parent=1 // pred_region
      %40 = dma.done [#allocation3], 128
    $region17: #{tpu_custom_call.1} parent=1 // pred_fallthru
      _
    // Predicated region
    $region18: #{tpu_custom_call.1} parent=1 // pred_check
      _
    $region19: #{tpu_custom_call.1} parent=1 // pred_check_branch
      %42 = sbr.rel (0) target = $region21
    $region20: #{tpu_custom_call.1} parent=1 // pred_region
      %44 = dma.done [#allocation6], 512
    $region21: #{tpu_custom_call.1} parent=1 // pred_fallthru
      _
    %v45 = vld [vmem:[#allocation2] sm:$0xff]
    %v46 = vld [vmem:[#allocation5] sm:$0xff]
    %v47 = vld [vmem:[#allocation5 + $0x8] sm:$0xff]
    %v48 = vld [vmem:[#allocation5 + $0x10] sm:$0xff]
    %v49 = vld [vmem:[#allocation5 + $0x18] sm:$0xff]
    %vm50 = vcmask 261120
    %v52 = vsel %vm50, %v45, 0
    %54 = vmatpush.msra.mxu0 0.0
    %55 = vmatpush.msra.mxu0 0.0
    %56 = vmatpush.msra.mxu0 0.0
    %57 = vmatpush.msra.mxu0 0.0
    %58 = vmatpush.msra.mxu0 0.0
    %59 = vmatpush.msra.mxu0 0.0
    %60 = vmatpush.msra.mxu0 0.0
    %61 = vmatpush.msra.mxu0 0.0
    %62 = vmatpush.msra.mxu0 0.0
    %63 = vmatpush.msra.mxu0 0.0
    %64 = vmatpush.msra.mxu0 0.0
    %65 = vmatpush.msra.mxu0 0.0
    %66 = vmatpush.msra.mxu0 %v49
    %67 = vmatpush.msra.mxu0 %v48
    %68 = vmatpush.msra.mxu0 %v47
    %69 = vmatpush.msra.mxu0 %v46
    %70 = vmatmul.f32.gmra.mxu0 %v52
    %v71 = vpop.f32.mrf.mxu0
    %v72 = vadd.f32 0.0, %v71
    %73 = vdwg.mxu0
    %p74 = scmp.eq.s32.totalorder 0, 0
    // Predicated region
    $region22: #{tpu_custom_call.1} parent=1 // pred_check
      %p75 = pneg %p74
    $region23: #{tpu_custom_call.1} parent=1 // pred_check_branch
      %77 = sbr.rel (%p75) target = $region25
    $region24: #{tpu_custom_call.1} parent=1 // pred_region
      %vm78 = vcmask 523264
      %79 = vst.msk [vmem:[#allocation7] sm:$0xff] %vm78, %v72
    $region25: #{tpu_custom_call.1} parent=1 // pred_fallthru
      _
    %p80 = scmp.ne.s32.totalorder 0, 0
    // Predicated region
    $region26: #{tpu_custom_call.1} parent=1 // pred_check
      %p81 = pneg %p80
    $region27: #{tpu_custom_call.1} parent=1 // pred_check_branch
      %83 = sbr.rel (%p81) target = $region29
    $region28: #{tpu_custom_call.1} parent=1 // pred_region
      %v84 = vld [vmem:[#allocation7] sm:$0xff]
      %v85 = vadd.f32 %v84, %v72
      %vm86 = vcmask 523264
      %87 = vst.msk [vmem:[#allocation7] sm:$0xff] %vm86, %v85
    $region29: #{tpu_custom_call.1} parent=1 // pred_fallthru
      _
    // Predicated region
    $region30: #{tpu_custom_call.1} parent=1 // pred_check
      %p88 = pneg %p74
    $region31: #{tpu_custom_call.1} parent=1 // pred_check_branch
      %90 = sbr.rel (%p88) target = $region33
    $region32: #{tpu_custom_call.1} parent=1 // pred_region
      %v91 = vld [vmem:[#allocation7] sm:$0xff]
      %v92 = vld [vmem:[%s2] sm:$0x1]
      %v94 = vperm.slane %v92, 0
      %v96 = vadd.f32 %v91, %v94
      %v97 = vmax.f32 %v96, 0.0
      %vm98 = vcmask 523264
      %99 = vst.msk [vmem:[#allocation7] sm:$0xff] %vm98, %v97
    $region33: #{tpu_custom_call.1} parent=1 // pred_fallthru
      _
    // Predicated region
    $region34: #{tpu_custom_call.1} parent=1 // pred_check
      _
    $region35: #{tpu_custom_call.1} parent=1 // pred_check_branch
      %101 = sbr.rel (0) target = $region37
    $region36: #{tpu_custom_call.1} parent=1 // pred_region
      %103 = vsyncadd [#allocation4], 0
      %s105 = sshll.u32 [#allocation7], 4
      %s106 = int_to_ptr.vmem [resolvable:$true] %s105
      %s107 = sshll.u32 %s3, 4
      %s108 = int_to_ptr.hbm [resolvable:$true] %s107
      %110 = dma.vmem_to_hbm [thread:$0]  %s106, 128, %s108, [#allocation4]
    $region37: #{tpu_custom_call.1} parent=1 // pred_fallthru
      _
    // Predicated region
    $region38: #{tpu_custom_call.1} parent=1 // pred_check
      _
    $region39: #{tpu_custom_call.1} parent=1 // pred_check_branch
      %112 = sbr.rel (0) target = $region41
    $region40: #{tpu_custom_call.1} parent=1 // pred_region
      %114 = dma.done [#allocation4], 128
    $region41: #{tpu_custom_call.1} parent=1 // pred_fallthru
      _
    %115 = vsyncpa [#allocation3], 1
    %116 = vsyncpa [#allocation6], 1
    %117 = vsyncpa [#allocation4], 1

</llo_original>
